<compile_context>
chip_gen: v7x
topology: tpu7x:2x2x1
jax: 0.10.0
libtpu: 0.0.40
codegen_flags: <defaults>
</compile_context>

<pallas_src>
import functools

import jax
import jax.numpy as jnp
from jax.experimental import pallas as pl
from jax.experimental.pallas import tpu as pltpu


def _pick_tile(dim, candidates=(512, 256, 128)):
    """Largest nice tile that divides `dim`; falls back to the full extent."""
    for c in candidates:
        if dim % c == 0:
            return c
    return dim  # block == full array dim -> no (8,128) divisibility constraint


def _tpu_compiler_params(semantics):
    # Mosaic-specific params only when actually lowering for TPU (keeps the script
    # runnable under the CPU interpret fallback used by the sandbox checker).
    if jax.default_backend() == "tpu":
        return pltpu.CompilerParams(dimension_semantics=semantics)
    return None


# ---------------------------------------------------------------------------
# Kernel 1: tiled matmul + bias  (gates_x = X @ W^T + b), fp32 accumulation.
# ---------------------------------------------------------------------------
def _matmul_bias_kernel(x_ref, w_ref, b_ref, o_ref, acc_ref):
    @pl.when(pl.program_id(2) == 0)
    def _():
        acc_ref[...] = jnp.zeros_like(acc_ref)

    acc_ref[...] += jnp.dot(x_ref[...], w_ref[...],
                            preferred_element_type=jnp.float32)

    @pl.when(pl.program_id(2) == pl.num_programs(2) - 1)
    def _():
        o_ref[...] = (acc_ref[...] + b_ref[...]).astype(o_ref.dtype)


def _input_projection(x_flat, w_t, bias_row):
    m, k = x_flat.shape
    n = w_t.shape[1]
    tm, tn, tk = _pick_tile(m), _pick_tile(n), _pick_tile(k)
    return pl.pallas_call(
        _matmul_bias_kernel,
        out_shape=jax.ShapeDtypeStruct((m, n), jnp.float32),
        grid=(m // tm, n // tn, k // tk),
        in_specs=[
            pl.BlockSpec((tm, tk), lambda i, j, kk: (i, kk)),
            pl.BlockSpec((tk, tn), lambda i, j, kk: (kk, j)),
            pl.BlockSpec((1, tn), lambda i, j, kk: (0, j)),
        ],
        out_specs=pl.BlockSpec((tm, tn), lambda i, j, kk: (i, j)),
        scratch_shapes=[pltpu.VMEM((tm, tn), jnp.float32)],
        compiler_params=_tpu_compiler_params(("parallel", "parallel", "arbitrary")),
    )(x_flat, w_t, bias_row)


# ---------------------------------------------------------------------------
# Kernel 2: LSTM recurrence over time, fused residual add + concat with attn.
# ---------------------------------------------------------------------------
def _lstm_step_kernel(gx_ref, whh_ref, inp_ref, attn_ref, out_ref, cat_ref,
                      h_scr, c_scr, *, hidden, residual):
    t = pl.program_id(0)

    @pl.when(t == 0)
    def _():
        h_scr[...] = jnp.zeros_like(h_scr)
        c_scr[...] = jnp.zeros_like(c_scr)

    # gates = x_t @ W_ih^T + b + h_{t-1} @ W_hh^T ; torch gate order (i, f, g, o).
    gates = gx_ref[0] + jnp.dot(h_scr[...], whh_ref[...],
                                preferred_element_type=jnp.float32)
    i_g = jax.nn.sigmoid(gates[:, 0 * hidden:1 * hidden])
    f_g = jax.nn.sigmoid(gates[:, 1 * hidden:2 * hidden])
    g_g = jnp.tanh(gates[:, 2 * hidden:3 * hidden])
    o_g = jax.nn.sigmoid(gates[:, 3 * hidden:4 * hidden])

    c_new = f_g * c_scr[...] + i_g * g_g
    h_new = o_g * jnp.tanh(c_new)
    c_scr[...] = c_new
    h_scr[...] = h_new

    res = h_new
    if residual:
        res = res + inp_ref[0].astype(jnp.float32)
    out_val = res.astype(out_ref.dtype)
    out_ref[0] = out_val

    # Fused concat: out_cat[..., :H] = out ; out_cat[..., H:] = attn.
    a_sz = attn_ref.shape[2]
    cat_ref[0, :, pl.ds(0, hidden)] = out_val.astype(cat_ref.dtype)
    cat_ref[0, :, pl.ds(hidden, a_sz)] = attn_ref[0].astype(cat_ref.dtype)


def lstm3_forward(inputs, params, *, residual=True, last=False):
    """Pallas equivalent of gnmt lstm3.forward (bi=False)."""
    # TODO(synk): bidirectional (bi=True) variant not implemented; module default is bi=False.
    inp, attn, inp_cat = inputs
    w_ih, w_hh, b_ih, b_hh = params            # torch layout: (4H, I), (4H, H), (4H,), (4H,)

    s, b, i_sz = inp_cat.shape
    h_sz = w_hh.shape[1]
    a_sz = attn.shape[2]

    # Pre-transpose weights so the 4H gate axis is lane-dense in both matmuls.
    w_ih_t = jnp.transpose(w_ih).astype(jnp.float32)          # (I, 4H)
    w_hh_t = jnp.transpose(w_hh).astype(jnp.float32)          # (H, 4H)
    bias_row = (b_ih + b_hh).reshape(1, 4 * h_sz).astype(jnp.float32)

    # Time-parallel input projection on the flattened (seq*batch, I) slab.
    gates_x = _input_projection(
        inp_cat.reshape(s * b, i_sz).astype(jnp.float32), w_ih_t, bias_row
    ).reshape(s, b, 4 * h_sz)

    out, out_cat = pl.pallas_call(
        functools.partial(_lstm_step_kernel, hidden=h_sz, residual=residual),
        out_shape=(
            jax.ShapeDtypeStruct((s, b, h_sz), inp.dtype),
            jax.ShapeDtypeStruct((s, b, h_sz + a_sz), inp.dtype),
        ),
        grid=(s,),
        in_specs=[
            pl.BlockSpec((1, b, 4 * h_sz), lambda t: (t, 0, 0)),   # gates_x[t]
            pl.BlockSpec((h_sz, 4 * h_sz), lambda t: (0, 0)),      # W_hh^T (resident)
            pl.BlockSpec((1, b, h_sz), lambda t: (t, 0, 0)),       # inp[t] (residual)
            pl.BlockSpec((1, b, a_sz), lambda t: (t, 0, 0)),       # attn[t] (concat)
        ],
        out_specs=(
            pl.BlockSpec((1, b, h_sz), lambda t: (t, 0, 0)),
            pl.BlockSpec((1, b, h_sz + a_sz), lambda t: (t, 0, 0)),
        ),
        scratch_shapes=[
            pltpu.VMEM((b, h_sz), jnp.float32),   # h carry
            pltpu.VMEM((b, h_sz), jnp.float32),   # c carry
        ],
        compiler_params=_tpu_compiler_params(("arbitrary",)),
    )(gates_x, w_hh_t, inp, attn)

    if last:
        return (out,)
    return (out, attn, out_cat)


if __name__ == "__main__":
    key = jax.random.PRNGKey(0)
    ks = jax.random.split(key, 6)

    # Small shapes consistent with lstm3(size=2*hidden): hidden=32, input=64.
    seq_len, batch, hidden = 8, 2, 32
    attn_size = hidden
    input_size = hidden + attn_size

    inp = jax.random.normal(ks[0], (seq_len, batch, hidden), dtype=jnp.float32)
    attn = jax.random.normal(ks[1], (seq_len, batch, attn_size), dtype=jnp.float32)
    inp_cat = jnp.concatenate([inp, attn], axis=2)

    scale = 0.1  # init_lstm_(layer, 0.1): uniform(-0.1, 0.1)
    w_ih = jax.random.uniform(ks[2], (4 * hidden, input_size), jnp.float32, -scale, scale)
    w_hh = jax.random.uniform(ks[3], (4 * hidden, hidden), jnp.float32, -scale, scale)
    b_ih = jax.random.uniform(ks[4], (4 * hidden,), jnp.float32, -scale, scale)
    b_hh = jax.random.uniform(ks[5], (4 * hidden,), jnp.float32, -scale, scale)

    outputs = lstm3_forward((inp, attn, inp_cat), (w_ih, w_hh, b_ih, b_hh))
    outputs = jax.tree_util.tree_map(jax.block_until_ready, outputs)
    out, attn_out, out_cat = outputs

    # Pure-JAX reference (PyTorch nn.LSTM semantics, gate order i, f, g, o).
    h = jnp.zeros((batch, hidden), jnp.float32)
    c = jnp.zeros((batch, hidden), jnp.float32)
    ref_steps = []
    for t in range(seq_len):
        gates = inp_cat[t] @ w_ih.T + b_ih + h @ w_hh.T + b_hh
        i_g = jax.nn.sigmoid(gates[:, :hidden])
        f_g = jax.nn.sigmoid(gates[:, hidden:2 * hidden])
        g_g = jnp.tanh(gates[:, 2 * hidden:3 * hidden])
        o_g = jax.nn.sigmoid(gates[:, 3 * hidden:])
        c = f_g * c + i_g * g_g
        h = o_g * jnp.tanh(c)
        ref_steps.append(h)
    ref_out = jnp.stack(ref_steps) + inp
    ref_cat = jnp.concatenate([ref_out, attn], axis=2)

    assert out.shape == (seq_len, batch, hidden)
    assert attn_out.shape == attn.shape and bool(jnp.allclose(attn_out, attn))
    assert out_cat.shape == (seq_len, batch, hidden + attn_size)
    assert bool(jnp.allclose(out, ref_out, atol=2e-3, rtol=2e-3)), \
        float(jnp.max(jnp.abs(out - ref_out)))
    assert bool(jnp.allclose(out_cat, ref_cat, atol=2e-3, rtol=2e-3))

    print("KERNEL_OK")
</pallas_src>

<mosaic_0001>
module attributes {stable_mosaic.version = 11 : i64} {
  func.func @_matmul_bias_kernel(%arg0: i32, %arg1: i32, %arg2: i32, %arg3: memref<16x64xf32, #tpu.memory_space<vmem>>, %arg4: memref<64x128xf32, #tpu.memory_space<vmem>>, %arg5: memref<1x128xf32, #tpu.memory_space<vmem>>, %arg6: memref<16x128xf32, #tpu.memory_space<vmem>>, %arg7: memref<16x128xf32, #tpu.memory_space<vmem>>) attributes {dimension_semantics = [#tpu.dimension_semantics<arbitrary>, #tpu.dimension_semantics<arbitrary>, #tpu.dimension_semantics<arbitrary>], iteration_bounds = array<i64: 1, 1, 1>, scalar_prefetch = 0 : i64, scratch_operands = 1 : i64, tpu.core_type = #tpu.core_type<tc>, window_params = [{transform_indices = @transform_0, window_bounds = array<i64: 16, 64>}, {transform_indices = @transform_1, window_bounds = array<i64: 64, 128>}, {transform_indices = @transform_2, window_bounds = array<i64: 1, 128>}, {transform_indices = @transform_3, window_bounds = array<i64: 16, 128>}]} {
    %c0_i32 = arith.constant 0 : i32
    %0 = arith.cmpi eq, %arg2, %c0_i32 : i32
    %1 = arith.extui %0 : i1 to i32
    %c0_i32_0 = arith.constant 0 : i32
    %2 = arith.cmpi ne, %1, %c0_i32_0 : i32
    scf.if %2 {
      %cst_10 = arith.constant 0.000000e+00 : f32
      %12 = vector.broadcast %cst_10 : f32 to vector<16x128xf32>
      %c0_11 = arith.constant 0 : index
      %c0_12 = arith.constant 0 : index
      %13 = vector.load %arg7[%c0_11, %c0_12] : memref<16x128xf32, #tpu.memory_space<vmem>>, vector<16x128xf32>
      tpu.vector_store %arg7[%c0_11, %c0_12], %12 {strides = array<i32>} : memref<16x128xf32, #tpu.memory_space<vmem>>, vector<16x128xf32>,
    } else {
    }
    %c0 = arith.constant 0 : index
    %c0_1 = arith.constant 0 : index
    %3 = vector.load %arg7[%c0, %c0_1] : memref<16x128xf32, #tpu.memory_space<vmem>>, vector<16x128xf32>
    %c0_2 = arith.constant 0 : index
    %c0_3 = arith.constant 0 : index
    %4 = vector.load %arg3[%c0_2, %c0_3] : memref<16x64xf32, #tpu.memory_space<vmem>>, vector<16x64xf32>
    %c0_4 = arith.constant 0 : index
    %c0_5 = arith.constant 0 : index
    %5 = vector.load %arg4[%c0_4, %c0_5] : memref<64x128xf32, #tpu.memory_space<vmem>>, vector<64x128xf32>
    %cst = arith.constant dense<0.000000e+00> : vector<16x128xf32>
    %6 = tpu.matmul %4, %5, %cst {dimension_numbers = #tpu.dot_dimension_numbers<[1], [0], [0], [1], [0, 0, 1, 1], [], []>} : vector<16x64xf32>, vector<64x128xf32>, vector<16x128xf32> -> vector<16x128xf32>
    %7 = arith.addf %3, %6 : vector<16x128xf32>
    %c0_6 = arith.constant 0 : index
    %c0_7 = arith.constant 0 : index
    %8 = vector.load %arg7[%c0_6, %c0_7] : memref<16x128xf32, #tpu.memory_space<vmem>>, vector<16x128xf32>
    tpu.vector_store %arg7[%c0_6, %c0_7], %7 {strides = array<i32>} : memref<16x128xf32, #tpu.memory_space<vmem>>, vector<16x128xf32>,
    %c0_i32_8 = arith.constant 0 : i32
    %9 = arith.cmpi eq, %arg2, %c0_i32_8 : i32
    %10 = arith.extui %9 : i1 to i32
    %c0_i32_9 = arith.constant 0 : i32
    %11 = arith.cmpi ne, %10, %c0_i32_9 : i32
    scf.if %11 {
      %c0_10 = arith.constant 0 : index
      %c0_11 = arith.constant 0 : index
      %12 = vector.load %arg7[%c0_10, %c0_11] : memref<16x128xf32, #tpu.memory_space<vmem>>, vector<16x128xf32>
      %c0_12 = arith.constant 0 : index
      %c0_13 = arith.constant 0 : index
      %13 = vector.load %arg5[%c0_12, %c0_13] : memref<1x128xf32, #tpu.memory_space<vmem>>, vector<1x128xf32>
      %14 = vector.broadcast %13 : vector<1x128xf32> to vector<16x128xf32>
      %15 = arith.addf %12, %14 : vector<16x128xf32>
      %c0_14 = arith.constant 0 : index
      %c0_15 = arith.constant 0 : index
      %16 = vector.load %arg6[%c0_14, %c0_15] : memref<16x128xf32, #tpu.memory_space<vmem>>, vector<16x128xf32>
      tpu.vector_store %arg6[%c0_14, %c0_15], %15 {strides = array<i32>} : memref<16x128xf32, #tpu.memory_space<vmem>>, vector<16x128xf32>,
    } else {
    }
    return
  }
  func.func @transform_0(%arg0: i32, %arg1: i32, %arg2: i32) -> (i32, i32) {
    %c0_i32 = arith.constant 0 : i32
    return %arg0, %arg2 : i32, i32
  }
  func.func @transform_1(%arg0: i32, %arg1: i32, %arg2: i32) -> (i32, i32) {
    %c0_i32 = arith.constant 0 : i32
    return %arg2, %arg1 : i32, i32
  }
  func.func @transform_2(%arg0: i32, %arg1: i32, %arg2: i32) -> (i32, i32) {
    %c0_i32 = arith.constant 0 : i32
    %c0_i32_0 = arith.constant 0 : i32
    return %c0_i32, %arg1 : i32, i32
  }
  func.func @transform_3(%arg0: i32, %arg1: i32, %arg2: i32) -> (i32, i32) {
    %c0_i32 = arith.constant 0 : i32
    return %arg0, %arg1 : i32, i32
  }
}

</mosaic_0001>

<llo_original>
// kernel: tpu_custom_call.1
$region0: #{tpu_custom_call.1}
  #allocation0 [shape = 'u32[]', space=smem, size = 0x4, offset = 0x4, fixed_abs, tag = 'smem constant byte address 0x4 - core index']
  #allocation1 [shape = 'u32[144,128]{1,0:T(1,128)}', space=vmem, size = 0x12000, scoped, tag = 'internal scratch']
  #allocation2 [shape = 'f32[16,128]{1,0:T(8,128)}', space=vmem, size = 0x2000, scoped, tag = 'scratch operand']
  %s0 = inlined_call_operand.hbm [shape: f32[16,64], index: 0, kind: input, shape index: {}]
  %s1 = inlined_call_operand.hbm [shape: f32[64,128], index: 1, kind: input, shape index: {}]
  %s2 = inlined_call_operand.vmem [shape: f32[1,128], index: 2, kind: input, shape index: {}]
  %s3 = inlined_call_operand.hbm [shape: f32[16,128], index: 3, kind: output, shape index: {}]
  %s4 = sld [smem:[#allocation0]]
  $region38: #{tpu_custom_call.1} parent=0
    _
  %s6 = ssub.s32 1, %s4
  %s7 = scalar_select 0, %s6, %s4
  $region1: #{tpu_custom_call.1} parent=0
    #allocation3 [shape = 'u8[8192]{0}', space=vmem, size = 0x2000, scoped, tag = 'input window, operand 0, single buffered']
    #allocation4 [shape = 's32[1]{0}', space=sflag, size = 0x4, scoped, tag = 'scoped memory for tpu_custom_call.1']
    #allocation5 [shape = 's32[1]{0}', space=sflag, size = 0x4, scoped, tag = 'scoped memory for tpu_custom_call.1']
    #allocation6 [shape = 'u8[32768]{0}', space=vmem, size = 0x8000, scoped, tag = 'input window, operand 1, single buffered']
    #allocation7 [shape = 's32[1]{0}', space=sflag, size = 0x4, scoped, tag = 'scoped memory for tpu_custom_call.1']
    #allocation8 [shape = 'u8[8192]{0}', space=vmem, size = 0x2000, scoped, tag = 'output window, operand 0, single buffered']
    %8 = vsyncpa [#allocation4], 0
    %9 = vsyncpa [#allocation7], 0
    %10 = vsyncpa [#allocation5], 0
    // Predicated region
    $region2: #{tpu_custom_call.1} parent=1 // pred_check
      _
    $region3: #{tpu_custom_call.1} parent=1 // pred_check_branch
      %12 = sbr.rel (0) target = $region5
    $region4: #{tpu_custom_call.1} parent=1 // pred_region
      %s14 = ssub.s32 256, 256
      %15 = vsyncadd [#allocation4], %s14
      %s16 = sshll.u32 [#allocation3], 4
      %s17 = int_to_ptr.vmem [resolvable:$true] %s16
      %22 = dma.hbm_to_vmem [thread:$0]  %s0, 256, %s17, [#allocation4], 128, 128, 8
    $region5: #{tpu_custom_call.1} parent=1 // pred_fallthru
      _
    // Predicated region
    $region6: #{tpu_custom_call.1} parent=1 // pred_check
      _
    $region7: #{tpu_custom_call.1} parent=1 // pred_check_branch
      %24 = sbr.rel (0) target = $region9
    $region8: #{tpu_custom_call.1} parent=1 // pred_region
      %s26 = ssub.s32 1024, 1024
      %27 = vsyncadd [#allocation7], %s26
      %s28 = sshll.u32 [#allocation6], 4
      %s29 = int_to_ptr.vmem [resolvable:$true] %s28
      %34 = dma.hbm_to_vmem [thread:$0]  %s1, 1024, %s29, [#allocation7], 128, 128, 8
    $region9: #{tpu_custom_call.1} parent=1 // pred_fallthru
      _
    // Predicated region
    $region10: #{tpu_custom_call.1} parent=1 // pred_check
      _
    $region11: #{tpu_custom_call.1} parent=1 // pred_check_branch
      %36 = sbr.rel (0) target = $region13
    $region12: #{tpu_custom_call.1} parent=1 // pred_region
      _
    $region13: #{tpu_custom_call.1} parent=1 // pred_fallthru
      _
    // Predicated region
    $region14: #{tpu_custom_call.1} parent=1 // pred_check
      _
    $region15: #{tpu_custom_call.1} parent=1 // pred_check_branch
      %38 = sbr.rel (0) target = $region17
    $region16: #{tpu_custom_call.1} parent=1 // pred_region
      %39 = dma.done [#allocation4], 256
    $region17: #{tpu_custom_call.1} parent=1 // pred_fallthru
      _
    // Predicated region
    $region18: #{tpu_custom_call.1} parent=1 // pred_check
      _
    $region19: #{tpu_custom_call.1} parent=1 // pred_check_branch
      %41 = sbr.rel (0) target = $region21
    $region20: #{tpu_custom_call.1} parent=1 // pred_region
      %42 = dma.done [#allocation7], 1024
    $region21: #{tpu_custom_call.1} parent=1 // pred_fallthru
      _
    %p43 = scmp.eq.s32.totalorder 0, 0
    // Predicated region
    $region22: #{tpu_custom_call.1} parent=1 // pred_check
      %p44 = pneg %p43
    $region23: #{tpu_custom_call.1} parent=1 // pred_check_branch
      %46 = sbr.rel (%p44) target = $region25
    $region24: #{tpu_custom_call.1} parent=1 // pred_region
      %47 = vst [vmem:[#allocation2] sm:$0xff] 0.0
      %48 = vst [vmem:[#allocation2 + $0x8] sm:$0xff] 0.0
    $region25: #{tpu_custom_call.1} parent=1 // pred_fallthru
      _
    %v49 = vld [vmem:[#allocation2] sm:$0xff]
    %v50 = vld [vmem:[#allocation2 + $0x8] sm:$0xff]
    %v51 = vld [vmem:[#allocation3] sm:$0xff]
    %v52 = vld [vmem:[#allocation3 + $0x8] sm:$0xff]
    %v53 = vld [vmem:[#allocation6] sm:$0xff]
    %v54 = vld [vmem:[#allocation6 + $0x8] sm:$0xff]
    %v55 = vld [vmem:[#allocation6 + $0x10] sm:$0xff]
    %v56 = vld [vmem:[#allocation6 + $0x18] sm:$0xff]
    %v57 = vld [vmem:[#allocation6 + $0x20] sm:$0xff]
    %v58 = vld [vmem:[#allocation6 + $0x28] sm:$0xff]
    %v59 = vld [vmem:[#allocation6 + $0x30] sm:$0xff]
    %v60 = vld [vmem:[#allocation6 + $0x38] sm:$0xff]
    %vm61 = vcmask 523264
    %v63 = vsel %vm61, %v51, 0
    %v66 = vsel %vm61, %v52, 0
    %68 = vmatprep.subr.mxu0 0.0
    %69 = vmatpush1.msra.mxu0 %v53
    %70 = vmatprep.subr.mxu0 0.0
    %71 = vmatpush1.msra.mxu0 %v54
    %72 = vmatprep.subr.mxu0 0.0
    %73 = vmatpush1.msra.mxu0 %v55
    %74 = vmatprep.subr.mxu0 0.0
    %75 = vmatpush1.msra.mxu0 %v56
    %76 = vmatprep.subr.mxu0 0.0
    %77 = vmatpush1.msra.mxu0 %v57
    %78 = vmatprep.subr.mxu0 0.0
    %79 = vmatpush1.msra.mxu0 %v58
    %80 = vmatprep.subr.mxu0 0.0
    %81 = vmatpush1.msra.mxu0 %v59
    %82 = vmatprep.subr.mxu0 0.0
    %83 = vmatpush1.msra.mxu0 %v60
    %84 = vmatprep.subr.mxu0 0.0
    %85 = vmatpush1.msra.mxu0 0.0
    %86 = vmatprep.subr.mxu0 0.0
    %87 = vmatpush1.msra.mxu0 0.0
    %88 = vmatprep.subr.mxu0 0.0
    %89 = vmatpush1.msra.mxu0 0.0
    %90 = vmatprep.subr.mxu0 0.0
    %91 = vmatpush1.msra.mxu0 0.0
    %92 = vmatprep.subr.mxu0 0.0
    %93 = vmatpush1.msra.mxu0 0.0
    %94 = vmatprep.subr.mxu0 0.0
    %95 = vmatpush1.msra.mxu0 0.0
    %96 = vmatprep.subr.mxu0 0.0
    %97 = vmatpush1.msra.mxu0 0.0
    %98 = vmatprep.subr.mxu0 0.0
    %99 = vmatpush1.msra.mxu0 0.0
    %100 = vmatprep.subr.mxu0 0.0
    %101 = vmatpush1.msra.mxu0 0.0
    %102 = vmatprep.subr.mxu0 0.0
    %103 = vmatpush1.msra.mxu0 0.0
    %104 = vmatprep.subr.mxu0 0.0
    %105 = vmatpush1.msra.mxu0 0.0
    %106 = vmatprep.subr.mxu0 0.0
    %107 = vmatpush1.msra.mxu0 0.0
    %108 = vmatprep.subr.mxu0 0.0
    %109 = vmatpush1.msra.mxu0 0.0
    %110 = vmatprep.subr.mxu0 0.0
    %111 = vmatpush1.msra.mxu0 0.0
    %112 = vmatprep.subr.mxu0 0.0
    %113 = vmatpush1.msra.mxu0 0.0
    %114 = vmatprep.subr.mxu0 0.0
    %115 = vmatpush1.msra.mxu0 0.0
    %116 = vmatprep.subr.mxu0 0.0
    %117 = vmatpush1.msra.mxu0 0.0
    %118 = vmatprep.subr.mxu0 0.0
    %119 = vmatpush1.msra.mxu0 0.0
    %120 = vmatprep.subr.mxu0 0.0
    %121 = vmatpush1.msra.mxu0 0.0
    %122 = vmatprep.subr.mxu0 0.0
    %123 = vmatpush1.msra.mxu0 0.0
    %124 = vmatprep.subr.mxu0 0.0
    %125 = vmatpush1.msra.mxu0 0.0
    %126 = vmatprep.subr.mxu0 0.0
    %127 = vmatpush1.msra.mxu0 0.0
    %128 = vmatprep.subr.mxu0 0.0
    %129 = vmatpush1.msra.mxu0 0.0
    %130 = vmatprep.subr.mxu0 0.0
    %131 = vmatpush1.msra.mxu0 0.0
    %132 = vmatprep.mubr.f32.mxu0 0.0
    %133 = vmatmul.mubr.f32.gmra.mrb[0].mxu0 %v63
    %v134 = vpop.f32.mrb[0].mxu0
    %v135 = vadd.f32 0.0, %v134
    %v136 = vpop.f32.mrb[0].mxu0
    %137 = vmatprep.mubr.f32.mxu0 0.0
    %138 = vmatmul.mubr.f32.gmra.mrb[0].mxu0 %v66
    %v139 = vpop.f32.mrb[0].mxu0
    %v140 = vadd.f32 0.0, %v139
    %v141 = vpop.f32.mrb[0].mxu0
    %142 = vdwg.mxu0
    %v143 = vadd.f32 %v49, %v135
    %v144 = vadd.f32 %v50, %v140
    %145 = vst [vmem:[#allocation2] sm:$0xff] %v143
    %146 = vst [vmem:[#allocation2 + $0x8] sm:$0xff] %v144
    // Predicated region
    $region26: #{tpu_custom_call.1} parent=1 // pred_check
      %p147 = pneg %p43
    $region27: #{tpu_custom_call.1} parent=1 // pred_check_branch
      %149 = sbr.rel (%p147) target = $region29
    $region28: #{tpu_custom_call.1} parent=1 // pred_region
      %v150 = vld [vmem:[#allocation2] sm:$0xff]
      %v151 = vld [vmem:[#allocation2 + $0x8] sm:$0xff]
      %v152 = vld [vmem:[%s2] sm:$0x1]
      %v154 = vlaneseq
      %v155 = vshrl.u32 %v154, 7
      %v156 = vsub.s32 0, %v155
      %v157 = vrot.slane %v152, %v156
      %v159 = vadd.f32 %v150, %v157
      %v160 = vadd.f32 %v151, %v157
      %161 = vst [vmem:[#allocation8] sm:$0xff] %v159
      %162 = vst [vmem:[#allocation8 + $0x8] sm:$0xff] %v160
    $region29: #{tpu_custom_call.1} parent=1 // pred_fallthru
      _
    // Predicated region
    $region30: #{tpu_custom_call.1} parent=1 // pred_check
      _
    $region31: #{tpu_custom_call.1} parent=1 // pred_check_branch
      %164 = sbr.rel (0) target = $region33
    $region32: #{tpu_custom_call.1} parent=1 // pred_region
      %s166 = ssub.s32 256, 256
      %167 = vsyncadd [#allocation5], %s166
      %s168 = sshll.u32 [#allocation8], 4
      %s169 = int_to_ptr.vmem [resolvable:$true] %s168
      %174 = dma.vmem_to_hbm [thread:$0]  %s169, 256, %s3, [#allocation5], 128, 128, 8
    $region33: #{tpu_custom_call.1} parent=1 // pred_fallthru
      _
    // Predicated region
    $region34: #{tpu_custom_call.1} parent=1 // pred_check
      _
    $region35: #{tpu_custom_call.1} parent=1 // pred_check_branch
      %176 = sbr.rel (0) target = $region37
    $region36: #{tpu_custom_call.1} parent=1 // pred_region
      %177 = dma.done [#allocation5], 256
    $region37: #{tpu_custom_call.1} parent=1 // pred_fallthru
      _
    %178 = vsyncpa [#allocation4], 1
    %179 = vsyncpa [#allocation7], 1
    %180 = vsyncpa [#allocation5], 1

</llo_original>
